<compile_context>
chip_gen: v5e
topology: v5e:2x2
jax: 0.10.0
libtpu: 0.0.40
codegen_flags: <defaults>
</compile_context>

<pallas_src>
import math

import jax
import jax.numpy as jnp
from jax import lax
from jax.experimental import pallas as pl
from jax.experimental.pallas import tpu as pltpu

TWO_PI = 2.0 * math.pi
HALF_PI = 0.5 * math.pi
_LANES = 128


def fourier_features_kernel(xt_ref, w2_ref, phase_ref, out_ref):
    # xt_ref:    (x_dim, tm)   lane-dense transposed coordinate tile
    # w2_ref:    (x_dim, 2*nf) 2*pi * [W.T | W.T]      (grid-invariant)
    # phase_ref: (1, 2*nf)     [0..0 | -pi/2..-pi/2]   (grid-invariant)
    # out_ref:   (tm, 2*nf)    [cos | sin]  one full-block, lane-0-aligned store
    xt = xt_ref[...].astype(jnp.float32)
    ang = lax.dot_general(
        xt, w2_ref[...],
        dimension_numbers=(((0,), (0,)), ((), ())),  # contract over x_dim
        preferred_element_type=jnp.float32)           # (tm, 2*nf) on the MXU
    out_ref[...] = jnp.cos(ang + phase_ref[...]).astype(out_ref.dtype)


def _round_up(x, m):
    return ((x + m - 1) // m) * m


def _choose_tm(M, tm_max):
    """Row tile. Rows live on the lane axis of the X block -> 128 quantum."""
    if M <= _LANES:
        return M  # single block whose dims equal the full array dims
    tm = min(_round_up(tm_max, _LANES), _round_up(M, _LANES))
    # v7x megacore: keep >= 2 grid steps when the problem would otherwise fit
    # in one giant tile, as long as each half still writes a useful chunk.
    if tm >= _round_up(M, _LANES) and M >= 2048:
        tm = _round_up((M + 1) // 2, _LANES)
    return tm


def set_fourier_features(X, frequency_matrix, *, tm=8192, out_dtype=None):
    """X: [B, N, x_dim]; frequency_matrix: [num_frequencies, x_dim].

    Returns [B, N, 2*num_frequencies] = [cos(2*pi*X@W.T) | sin(2*pi*X@W.T)].
    """
    B, N, XD = X.shape
    nf = frequency_matrix.shape[0]
    M = B * N
    out_dtype = X.dtype if out_dtype is None else jnp.dtype(out_dtype)

    tm = _choose_tm(M, tm)
    grid = (pl.cdiv(M, tm),)  # partial last block is masked by Pallas

    # Lane-dense coordinates: (x_dim, M). Cheap relative to output writeback.
    xt = X.reshape(M, XD).T

    # Fold 2*pi into the tiny duplicated weight; sin via cos(a - pi/2).
    wt = frequency_matrix.T.astype(jnp.float32)              # (x_dim, nf)
    w2 = TWO_PI * jnp.concatenate([wt, wt], axis=1)          # (x_dim, 2*nf)
    phase = jnp.concatenate(
        [jnp.zeros((1, nf), jnp.float32),
         jnp.full((1, nf), -HALF_PI, jnp.float32)], axis=1)  # (1, 2*nf)

    x_item = jnp.dtype(X.dtype).itemsize
    o_item = jnp.dtype(out_dtype).itemsize
    # VMEM budget: lane/sublane-padded, double-buffered tiles + headroom.
    out_buf = tm * _round_up(2 * nf, _LANES) * max(o_item, 4)
    x_buf = _round_up(XD, 8) * _round_up(tm, _LANES) * max(x_item, 4)
    vmem_limit = int(min(max(2 * (out_buf + x_buf) + (8 << 20), 16 << 20),
                         48 << 20))

    cost = pl.CostEstimate(
        flops=2 * M * XD * (2 * nf),
        transcendentals=M * 2 * nf,
        bytes_accessed=(M * XD * x_item + M * 2 * nf * o_item
                        + (w2.size + phase.size) * 4),
    )

    out2d = pl.pallas_call(
        fourier_features_kernel,
        out_shape=jax.ShapeDtypeStruct((M, 2 * nf), out_dtype),
        grid_spec=pltpu.PrefetchScalarGridSpec(
            num_scalar_prefetch=0,
            grid=grid,
            in_specs=[
                pl.BlockSpec((XD, tm), lambda i: (0, i)),       # coords (T)
                pl.BlockSpec((XD, 2 * nf), lambda i: (0, 0)),   # resident w2
                pl.BlockSpec((1, 2 * nf), lambda i: (0, 0)),    # resident phase
            ],
            out_specs=pl.BlockSpec((tm, 2 * nf), lambda i: (i, 0)),
        ),
        compiler_params=pltpu.CompilerParams(
            dimension_semantics=("parallel",),
            vmem_limit_bytes=vmem_limit),
        cost_estimate=cost,
    )(xt, w2, phase)

    return out2d.reshape(B, N, 2 * nf)


def reference_set_fourier_features(X, frequency_matrix):
    B, N, XD = X.shape
    pre = X.reshape(-1, XD).astype(jnp.float32) @ frequency_matrix.T.astype(
        jnp.float32)
    feats = jnp.concatenate(
        [jnp.cos(TWO_PI * pre), jnp.sin(TWO_PI * pre)], axis=1)
    return feats.reshape(B, N, -1)


if __name__ == "__main__":
    # Module hyper-params (mirrors SetFourierFeatures.__init__).
    B, N, X_DIM = 2, 8, 4
    NUM_FREQUENCIES = 20
    INIT_STD = 1.0

    key = jax.random.PRNGKey(0)
    k_freq, k_x, k_x2, k_x3 = jax.random.split(key, 4)

    # Deterministic synthetic parameter: frequency matrix ~ N(0, init_std^2).
    frequency_matrix = INIT_STD * jax.random.normal(
        k_freq, (NUM_FREQUENCIES, X_DIM), dtype=jnp.float32)

    # Input coordinates: [Batch_Size, Num_Points, X_Dim].
    X = jax.random.normal(k_x, (B, N, X_DIM), dtype=jnp.float32)
    out = jax.block_until_ready(set_fourier_features(X, frequency_matrix))
    ref = reference_set_fourier_features(X, frequency_matrix)
    assert out.shape == (B, N, 2 * NUM_FREQUENCIES), out.shape
    assert jnp.allclose(out, ref, atol=5e-5, rtol=1e-5), (
        float(jnp.max(jnp.abs(out - ref))))

    # B*N not aligned to any tile quantum -> single partial block.
    X2 = jax.random.normal(k_x2, (3, 5, X_DIM), dtype=jnp.float32)
    out2 = jax.block_until_ready(set_fourier_features(X2, frequency_matrix))
    ref2 = reference_set_fourier_features(X2, frequency_matrix)
    assert out2.shape == (3, 5, 2 * NUM_FREQUENCIES), out2.shape
    assert jnp.allclose(out2, ref2, atol=5e-5, rtol=1e-5), (
        float(jnp.max(jnp.abs(out2 - ref2))))

    # Larger case: multi-step cdiv grid + masked, partially-valid last block.
    X3 = jax.random.normal(k_x3, (4, 700, X_DIM), dtype=jnp.float32)
    out3 = jax.block_until_ready(set_fourier_features(X3, frequency_matrix))
    ref3 = reference_set_fourier_features(X3, frequency_matrix)
    assert out3.shape == (4, 700, 2 * NUM_FREQUENCIES), out3.shape
    assert jnp.allclose(out3, ref3, atol=5e-5, rtol=1e-5), (
        float(jnp.max(jnp.abs(out3 - ref3))))

    print("KERNEL_OK")
</pallas_src>

<mosaic_0001>
module attributes {stable_mosaic.version = 11 : i64} {
  func.func @fourier_features_kernel(%arg0: i32, %arg1: memref<4x16xf32, #tpu.memory_space<vmem>>, %arg2: memref<4x40xf32, #tpu.memory_space<vmem>>, %arg3: memref<1x40xf32, #tpu.memory_space<vmem>>, %arg4: memref<16x40xf32, #tpu.memory_space<vmem>>) attributes {dimension_semantics = [#tpu.dimension_semantics<parallel>], iteration_bounds = array<i64: 1>, scalar_prefetch = 0 : i64, scratch_operands = 0 : i64, tpu.core_type = #tpu.core_type<tc>, window_params = [{transform_indices = @transform_0, window_bounds = array<i64: 4, 16>}, {pipeline_mode = #tpu.pipeline_mode<synchronous>, transform_indices = @transform_1, window_bounds = array<i64: 4, 40>}, {pipeline_mode = #tpu.pipeline_mode<synchronous>, transform_indices = @transform_2, window_bounds = array<i64: 1, 40>}, {transform_indices = @transform_3, window_bounds = array<i64: 16, 40>}]} {
    %c0 = arith.constant 0 : index
    %c0_0 = arith.constant 0 : index
    %0 = vector.load %arg1[%c0, %c0_0] : memref<4x16xf32, #tpu.memory_space<vmem>>, vector<4x16xf32>
    %c0_1 = arith.constant 0 : index
    %c0_2 = arith.constant 0 : index
    %1 = vector.load %arg2[%c0_1, %c0_2] : memref<4x40xf32, #tpu.memory_space<vmem>>, vector<4x40xf32>
    %cst = arith.constant dense<0.000000e+00> : vector<16x40xf32>
    %2 = tpu.matmul %0, %1, %cst {dimension_numbers = #tpu.dot_dimension_numbers<[0], [0], [1], [1], [0, 1, 1, 1], [], []>} : vector<4x16xf32>, vector<4x40xf32>, vector<16x40xf32> -> vector<16x40xf32>
    %c0_3 = arith.constant 0 : index
    %c0_4 = arith.constant 0 : index
    %3 = vector.load %arg3[%c0_3, %c0_4] : memref<1x40xf32, #tpu.memory_space<vmem>>, vector<1x40xf32>
    %4 = vector.broadcast %3 : vector<1x40xf32> to vector<16x40xf32>
    %5 = arith.addf %2, %4 : vector<16x40xf32>
    %6 = math.cos %5 : vector<16x40xf32>
    %c0_5 = arith.constant 0 : index
    %c0_6 = arith.constant 0 : index
    %7 = vector.load %arg4[%c0_5, %c0_6] : memref<16x40xf32, #tpu.memory_space<vmem>>, vector<16x40xf32>
    tpu.vector_store %arg4[%c0_5, %c0_6], %6 {strides = array<i32>} : memref<16x40xf32, #tpu.memory_space<vmem>>, vector<16x40xf32>,
    return
  }
  func.func @transform_0(%arg0: i32) -> (i32, i32) {
    %c0_i32 = arith.constant 0 : i32
    %c0_i32_0 = arith.constant 0 : i32
    return %c0_i32, %arg0 : i32, i32
  }
  func.func @transform_1(%arg0: i32) -> (i32, i32) {
    %c0_i32 = arith.constant 0 : i32
    %c0_i32_0 = arith.constant 0 : i32
    %c0_i32_1 = arith.constant 0 : i32
    return %c0_i32, %c0_i32_0 : i32, i32
  }
  func.func @transform_2(%arg0: i32) -> (i32, i32) {
    %c0_i32 = arith.constant 0 : i32
    %c0_i32_0 = arith.constant 0 : i32
    %c0_i32_1 = arith.constant 0 : i32
    return %c0_i32, %c0_i32_0 : i32, i32
  }
  func.func @transform_3(%arg0: i32) -> (i32, i32) {
    %c0_i32 = arith.constant 0 : i32
    %c0_i32_0 = arith.constant 0 : i32
    return %arg0, %c0_i32 : i32, i32
  }
}

</mosaic_0001>

<llo_original>
// kernel: tpu_custom_call.1
$region0: #{tpu_custom_call.1}
  #allocation0 [shape = 'u32[]', space=smem, size = 0x4, offset = 0x4, fixed_abs, tag = 'smem constant byte address 0x4 - core index']
  #allocation1 [shape = 'u32[72,128]{1,0:T(1,128)}', space=vmem, size = 0x9000, scoped, tag = 'internal scratch']
  %s0 = inlined_call_operand.hbm [shape: f32[4,16], index: 0, kind: input, shape index: {}]
  %s1 = inlined_call_operand.hbm [shape: f32[4,40], index: 1, kind: input, shape index: {}]
  %s2 = inlined_call_operand.vmem [shape: f32[1,40], index: 2, kind: input, shape index: {}]
  %s3 = inlined_call_operand.hbm [shape: f32[16,40], index: 3, kind: output, shape index: {}]
  %s4 = sld [smem:[#allocation0]]
  $region30: #{tpu_custom_call.1} parent=0
    _
  %s6 = ssub.s32 1, %s4
  %s7 = scalar_select 0, %s6, %s4
  $region1: #{tpu_custom_call.1} parent=0
    #allocation2 [shape = 'u8[2048]{0}', space=vmem, size = 0x800, scoped, tag = 'input window, operand 0, single buffered']
    #allocation3 [shape = 's32[1]{0}', space=sflag, size = 0x4, scoped, tag = 'scoped memory for tpu_custom_call.1']
    #allocation4 [shape = 's32[1]{0}', space=sflag, size = 0x4, scoped, tag = 'scoped memory for tpu_custom_call.1']
    #allocation5 [shape = 'u8[2048]{0}', space=vmem, size = 0x800, scoped, tag = 'input window, operand 1, single buffered']
    #allocation6 [shape = 's32[1]{0}', space=sflag, size = 0x4, scoped, tag = 'scoped memory for tpu_custom_call.1']
    #allocation7 [shape = 'u8[8192]{0}', space=vmem, size = 0x2000, scoped, tag = 'output window, operand 0, single buffered']
    %8 = vsyncpa [#allocation3], 0
    %9 = vsyncpa [#allocation6], 0
    %10 = vsyncpa [#allocation4], 0
    // Predicated region
    $region2: #{tpu_custom_call.1} parent=1 // pred_check
      _
    $region3: #{tpu_custom_call.1} parent=1 // pred_check_branch
      %12 = sbr.rel (0) target = $region5
    $region4: #{tpu_custom_call.1} parent=1 // pred_region
      %14 = vsyncadd [#allocation3], 0
      %s16 = sshll.u32 %s0, 4
      %s17 = int_to_ptr.hbm [resolvable:$true] %s16
      %s18 = sshll.u32 [#allocation2], 4
      %s19 = int_to_ptr.vmem [resolvable:$true] %s18
      %21 = dma.hbm_to_vmem [thread:$0]  %s17, 64, %s19, [#allocation3]
    $region5: #{tpu_custom_call.1} parent=1 // pred_fallthru
      _
    // Predicated region
    $region6: #{tpu_custom_call.1} parent=1 // pred_check
      _
    $region7: #{tpu_custom_call.1} parent=1 // pred_check_branch
      %23 = sbr.rel (0) target = $region9
    $region8: #{tpu_custom_call.1} parent=1 // pred_region
      %25 = vsyncadd [#allocation6], 0
      %s27 = sshll.u32 %s1, 4
      %s28 = int_to_ptr.hbm [resolvable:$true] %s27
      %s29 = sshll.u32 [#allocation5], 4
      %s30 = int_to_ptr.vmem [resolvable:$true] %s29
      %32 = dma.hbm_to_vmem [thread:$0]  %s28, 64, %s30, [#allocation6]
    $region9: #{tpu_custom_call.1} parent=1 // pred_fallthru
      _
    // Predicated region
    $region10: #{tpu_custom_call.1} parent=1 // pred_check
      _
    $region11: #{tpu_custom_call.1} parent=1 // pred_check_branch
      %34 = sbr.rel (0) target = $region13
    $region12: #{tpu_custom_call.1} parent=1 // pred_region
      _
    $region13: #{tpu_custom_call.1} parent=1 // pred_fallthru
      _
    // Predicated region
    $region14: #{tpu_custom_call.1} parent=1 // pred_check
      _
    $region15: #{tpu_custom_call.1} parent=1 // pred_check_branch
      %36 = sbr.rel (0) target = $region17
    $region16: #{tpu_custom_call.1} parent=1 // pred_region
      %38 = dma.done [#allocation3], 64
    $region17: #{tpu_custom_call.1} parent=1 // pred_fallthru
      _
    // Predicated region
    $region18: #{tpu_custom_call.1} parent=1 // pred_check
      _
    $region19: #{tpu_custom_call.1} parent=1 // pred_check_branch
      %40 = sbr.rel (0) target = $region21
    $region20: #{tpu_custom_call.1} parent=1 // pred_region
      %42 = dma.done [#allocation6], 64
    $region21: #{tpu_custom_call.1} parent=1 // pred_fallthru
      _
    %v43 = vld [vmem:[#allocation2] sm:$0xf]
    %v44 = vld [vmem:[#allocation5] sm:$0xf]
    %v45 = vld [vmem:[%s2] sm:$0x1]
    %v47 = vperm.slane %v45, 0
    %49 = vxpose.xlu0.b32.start [1/16] %v43, 128
    %50 = vxpose.xlu0.b32.cont [2/16] 0.0, 128
    %51 = vxpose.xlu0.b32.cont [3/16] 0.0, 128
    %52 = vxpose.xlu0.b32.cont [4/16] 0.0, 128
    %53 = vxpose.xlu0.b32.cont [5/16] 0.0, 128
    %54 = vxpose.xlu0.b32.cont [6/16] 0.0, 128
    %55 = vxpose.xlu0.b32.cont [7/16] 0.0, 128
    %56 = vxpose.xlu0.b32.cont [8/16] 0.0, 128
    %57 = vxpose.xlu0.b32.cont [9/16] 0.0, 128
    %58 = vxpose.xlu0.b32.cont [10/16] 0.0, 128
    %59 = vxpose.xlu0.b32.cont [11/16] 0.0, 128
    %60 = vxpose.xlu0.b32.cont [12/16] 0.0, 128
    %61 = vxpose.xlu0.b32.cont [13/16] 0.0, 128
    %62 = vxpose.xlu0.b32.cont [14/16] 0.0, 128
    %63 = vxpose.xlu0.b32.cont [15/16] 0.0, 128
    %64 = vxpose.xlu0.b32.end [16/16] 0.0, 128
    %v65 = vpop.trf.xlu0
    %v66 = vpop.trf.xlu0
    %v67 = vpop.trf.xlu0
    %v68 = vpop.trf.xlu0
    %v69 = vpop.trf.xlu0
    %v70 = vpop.trf.xlu0
    %v71 = vpop.trf.xlu0
    %v72 = vpop.trf.xlu0
    %v73 = vpop.trf.xlu0
    %v74 = vpop.trf.xlu0
    %v75 = vpop.trf.xlu0
    %v76 = vpop.trf.xlu0
    %v77 = vpop.trf.xlu0
    %v78 = vpop.trf.xlu0
    %v79 = vpop.trf.xlu0
    %v80 = vpop.trf.xlu0
    %vm81 = vcmask 31744
    %v83 = vsel %vm81, %v65, 0
    %v86 = vsel %vm81, %v66, 0
    %vm88 = vcmask 1043456
    %v90 = vsel %vm88, %v44, 0
    %92 = vmatpush.msra.mxu0 0.0
    %93 = vmatpush.msra.mxu0 0.0
    %94 = vmatpush.msra.mxu0 0.0
    %95 = vmatpush.msra.mxu0 0.0
    %96 = vmatpush.msra.mxu0 0.0
    %97 = vmatpush.msra.mxu0 0.0
    %98 = vmatpush.msra.mxu0 0.0
    %99 = vmatpush.msra.mxu0 0.0
    %100 = vmatpush.msra.mxu0 0.0
    %101 = vmatpush.msra.mxu0 0.0
    %102 = vmatpush.msra.mxu0 0.0
    %103 = vmatpush.msra.mxu0 0.0
    %104 = vmatpush.msra.mxu0 0.0
    %105 = vmatpush.msra.mxu0 0.0
    %106 = vmatpush.msra.mxu0 0.0
    %107 = vmatpush.msra.mxu0 %v90
    %108 = vmatmul.f32.gmra.mxu0 %v83
    %v109 = vpop.f32.mrf.mxu0
    %v110 = vadd.f32 %v47, %v109
    %111 = vmatmul.f32.gmra.mxu0 %v86
    %v112 = vpop.f32.mrf.mxu0
    %v113 = vadd.f32 %v47, %v112
    %114 = vdwg.mxu0
    %v115 = vand.u32 2147483647, %v110
    %vm116 = vcmp.le.f32.partialorder %v115, 0.7853982
    %vm117 = vcmp.lt.s32.totalorder %v110, 0
    %v118 = vand.u32 %v110, 2139095040
    %v119 = vshrl.u32 %v118, 23
    %v120 = vsub.s32 %v119, 127
    %v121 = vand.u32 2147483647, %v110
    %v122 = vand.u32 %v121, 8388607
    %v123 = vor.u32 %v122, 8388608
    %v124 = vsub.s32 0, %v123
    %v125 = vadd.s32 %v120, 1
    %vm126 = vcmp.gt.s32.totalorder %v125, 0
    %v127 = vsel %vm126, %v125, 0
    %v128 = vshrl.u32 %v127, 5
    %v129 = vand.u32 %v127, 31
    %v130 = vsub.s32 32, %v129
    %v131 = vshrl.u32 683565275, %v130
    %v132 = vshll.u32 683565275, %v129
    %v133 = vshrl.u32 2475754826, %v130
    %v134 = vor.u32 %v132, %v133
    %v135 = vshll.u32 2475754826, %v129
    %v136 = vshrl.u32 2131351028, %v130
    %v137 = vor.u32 %v135, %v136
    %v138 = vshll.u32 2131351028, %v129
    %v139 = vshrl.u32 2102212464, %v130
    %v140 = vor.u32 %v138, %v139
    %v141 = vshll.u32 2102212464, %v129
    %v142 = vshrl.u32 920167782, %v130
    %v143 = vor.u32 %v141, %v142
    %v144 = vshll.u32 920167782, %v129
    %v145 = vshrl.u32 1326507024, %v130
    %v146 = vor.u32 %v144, %v145
    %vm147 = vcmp.lt.s32.totalorder %v128, 1
    %vm148 = vcmp.lt.s32.totalorder %v128, 2
    %vm149 = vcmp.lt.s32.totalorder %v128, 3
    %vm150 = vcmp.lt.s32.totalorder %v128, 4
    %v151 = vsel %vm147, %v131, %v134
    %v152 = vsel %vm150, %v140, 2102212464
    %v153 = vsel %vm149, %v137, %v152
    %v154 = vsel %vm148, %v151, %v153
    %v155 = vsel %vm147, %v134, %v137
    %v156 = vsel %vm150, %v143, 920167782
    %v157 = vsel %vm149, %v140, %v156
    %v158 = vsel %vm148, %v155, %v157
    %v159 = vsel %vm147, %v137, %v140
    %v160 = vsel %vm150, %v146, 1326507024
    %v161 = vsel %vm149, %v143, %v160
    %v162 = vsel %vm148, %v159, %v161
    %v163 = vshll.u32 %v123, 8
    %v164 = vand.u32 %v163, 65535
    %v165 = vshrl.u32 %v163, 16
    %v166 = vand.u32 %v162, 65535
    %v167 = vshrl.u32 %v162, 16
    %v168 = vmul.u32 %v164, %v166
    %v169 = vmul.u32 %v164, %v167
    %v170 = vmul.u32 %v165, %v166
    %v171 = vmul.u32 %v165, %v167
    %v172 = vshll.u32 %v169, 16
    %v173 = vshrl.u32 %v169, 16
    %v174 = vshll.u32 %v170, 16
    %v175 = vshrl.u32 %v170, 16
    %vm176 = vc.u32 %v168, %v172
    %v177 = vsel %vm176, 1, 0
    %v178 = vadd.s32 %v168, %v172
    %v179 = vadd.s32 %v171, %v177
    %vm180 = vc.u32 %v178, %v174
    %v181 = vsel %vm180, 1, 0
    %v182 = vadd.s32 %v178, %v174
    %v183 = vadd.s32 %v179, %v181
    %v184 = vadd.s32 %v183, %v173
    %v185 = vadd.s32 %v184, %v175
    %v186 = vand.u32 %v163, 65535
    %v187 = vshrl.u32 %v163, 16
    %v188 = vand.u32 %v158, 65535
    %v189 = vshrl.u32 %v158, 16
    %v190 = vmul.u32 %v186, %v188
    %v191 = vmul.u32 %v186, %v189
    %v192 = vmul.u32 %v187, %v188
    %v193 = vmul.u32 %v187, %v189
    %v194 = vshll.u32 %v191, 16
    %v195 = vshrl.u32 %v191, 16
    %v196 = vshll.u32 %v192, 16
    %v197 = vshrl.u32 %v192, 16
    %vm198 = vc.u32 %v190, %v194
    %v199 = vsel %vm198, 1, 0
    %v200 = vadd.s32 %v190, %v194
    %v201 = vadd.s32 %v193, %v199
    %vm202 = vc.u32 %v200, %v196
    %v203 = vsel %vm202, 1, 0
    %v204 = vadd.s32 %v200, %v196
    %v205 = vadd.s32 %v201, %v203
    %v206 = vadd.s32 %v205, %v195
    %v207 = vadd.s32 %v206, %v197
    %v208 = vmul.u32 %v163, %v154
    %v209 = vadd.s32 %v185, %v204
    %vm210 = vc.u32 %v185, %v204
    %v211 = vadd.s32 %v207, 1
    %v212 = vsel %vm210, %v211, %v207
    %v213 = vadd.s32 %v208, %v212
    %v214 = vadd.s32 %v213, 536870912
    %v215 = vshrl.u32 %v214, 30
    %v216 = vshll.u32 %v215, 30
    %v217 = vsub.s32 %v213, %v216
    %vm218 = vcmp.lt.s32.totalorder %v217, 0
    %v219 = vsub.s32 0, %v217
    %v220 = vsel %vm218, %v219, %v217
    %v221 = vclz %v220
    %v222 = vsub.s32 %v221, 2
    %vm223 = vcmp.gt.s32.totalorder 0, %v222
    %v224 = vsel %vm223, 0, %v222
    %v225 = vsub.s32 32, %v224
    %v226 = vshll.u32 %v217, %v224
    %v227 = vshrl.u32 %v209, %v225
    %v228 = vor.u32 %v226, %v227
    %v229 = vsub.s32 4294967266, %v224
    %v230 = vadd.s32 %v229, 127
    %v231 = vshll.u32 %v230, 23
    %v232 = vor.u32 4788187, %v231
    %v233 = vand.u32 2147483647, %v232
    %v235 = vcvt.s32.f32 %v228
    %v236 = vmul.f32 %v235, %v233
    %v237 = vxor.u32 %v236, 2147483648
    %v238 = vsel %vm117, %v237, %v236
    %v239 = vsub.s32 4, %v215
    %v240 = vsel %vm117, %v239, %v215
    %v241 = vsel %vm116, %v110, %v238
    %v242 = vsel %vm116, 0, %v240
    %v243 = vmul.f32 %v241, %v241
    %v244 = vmul.f32 %v243, -0.001358992
    %v245 = vadd.f32 %v244, 0.041655596
    %v246 = vmul.f32 %v243, %v245
    %v247 = vadd.f32 %v246, -0.4999988
    %v248 = vmul.f32 %v243, %v247
    %v249 = vadd.f32 1.0, %v248
    %v250 = vmul.f32 %v241, %v241
    %v251 = vmul.f32 %v250, -0.00019511016
    %v252 = vadd.f32 %v251, 0.008332121
    %v253 = vmul.f32 %v250, %v252
    %v254 = vadd.f32 %v253, -0.16666654
    %v255 = vmul.f32 %v250, %v254
    %v256 = vadd.f32 %v255, 1.0
    %v257 = vmul.f32 %v256, %v241
    %vm258 = vweird.f32 %v110
    %v259 = vand.u32 %v242, 3
    %vm260 = vcmp.lt.s32.totalorder %v259, 2
    %vm261 = vcmp.eq.s32.totalorder %v259, 0
    %v262 = vxor.u32 %v257, 2147483648
    %v263 = vsel %vm261, %v249, %v262
    %vm264 = vcmp.eq.s32.totalorder %v259, 2
    %v265 = vxor.u32 %v249, 2147483648
    %v266 = vsel %vm264, %v265, %v257
    %v267 = vsel %vm260, %v263, %v266
    %v268 = vsel %vm258, nan, %v267
    %v269 = vand.u32 2147483647, %v113
    %vm270 = vcmp.le.f32.partialorder %v269, 0.7853982
    %vm271 = vcmp.lt.s32.totalorder %v113, 0
    %v272 = vand.u32 %v113, 2139095040
    %v273 = vshrl.u32 %v272, 23
    %v274 = vsub.s32 %v273, 127
    %v275 = vand.u32 2147483647, %v113
    %v276 = vand.u32 %v275, 8388607
    %v277 = vor.u32 %v276, 8388608
    %v278 = vsub.s32 0, %v277
    %v279 = vadd.s32 %v274, 1
    %vm280 = vcmp.gt.s32.totalorder %v279, 0
    %v281 = vsel %vm280, %v279, 0
    %v282 = vshrl.u32 %v281, 5
    %v283 = vand.u32 %v281, 31
    %v284 = vsub.s32 32, %v283
    %v285 = vshrl.u32 683565275, %v284
    %v286 = vshll.u32 683565275, %v283
    %v287 = vshrl.u32 2475754826, %v284
    %v288 = vor.u32 %v286, %v287
    %v289 = vshll.u32 2475754826, %v283
    %v290 = vshrl.u32 2131351028, %v284
    %v291 = vor.u32 %v289, %v290
    %v292 = vshll.u32 2131351028, %v283
    %v293 = vshrl.u32 2102212464, %v284
    %v294 = vor.u32 %v292, %v293
    %v295 = vshll.u32 2102212464, %v283
    %v296 = vshrl.u32 920167782, %v284
    %v297 = vor.u32 %v295, %v296
    %v298 = vshll.u32 920167782, %v283
    %v299 = vshrl.u32 1326507024, %v284
    %v300 = vor.u32 %v298, %v299
    %vm301 = vcmp.lt.s32.totalorder %v282, 1
    %vm302 = vcmp.lt.s32.totalorder %v282, 2
    %vm303 = vcmp.lt.s32.totalorder %v282, 3
    %vm304 = vcmp.lt.s32.totalorder %v282, 4
    %v305 = vsel %vm301, %v285, %v288
    %v306 = vsel %vm304, %v294, 2102212464
    %v307 = vsel %vm303, %v291, %v306
    %v308 = vsel %vm302, %v305, %v307
    %v309 = vsel %vm301, %v288, %v291
    %v310 = vsel %vm304, %v297, 920167782
    %v311 = vsel %vm303, %v294, %v310
    %v312 = vsel %vm302, %v309, %v311
    %v313 = vsel %vm301, %v291, %v294
    %v314 = vsel %vm304, %v300, 1326507024
    %v315 = vsel %vm303, %v297, %v314
    %v316 = vsel %vm302, %v313, %v315
    %v317 = vshll.u32 %v277, 8
    %v318 = vand.u32 %v317, 65535
    %v319 = vshrl.u32 %v317, 16
    %v320 = vand.u32 %v316, 65535
    %v321 = vshrl.u32 %v316, 16
    %v322 = vmul.u32 %v318, %v320
    %v323 = vmul.u32 %v318, %v321
    %v324 = vmul.u32 %v319, %v320
    %v325 = vmul.u32 %v319, %v321
    %v326 = vshll.u32 %v323, 16
    %v327 = vshrl.u32 %v323, 16
    %v328 = vshll.u32 %v324, 16
    %v329 = vshrl.u32 %v324, 16
    %vm330 = vc.u32 %v322, %v326
    %v331 = vsel %vm330, 1, 0
    %v332 = vadd.s32 %v322, %v326
    %v333 = vadd.s32 %v325, %v331
    %vm334 = vc.u32 %v332, %v328
    %v335 = vsel %vm334, 1, 0
    %v336 = vadd.s32 %v332, %v328
    %v337 = vadd.s32 %v333, %v335
    %v338 = vadd.s32 %v337, %v327
    %v339 = vadd.s32 %v338, %v329
    %v340 = vand.u32 %v317, 65535
    %v341 = vshrl.u32 %v317, 16
    %v342 = vand.u32 %v312, 65535
    %v343 = vshrl.u32 %v312, 16
    %v344 = vmul.u32 %v340, %v342
    %v345 = vmul.u32 %v340, %v343
    %v346 = vmul.u32 %v341, %v342
    %v347 = vmul.u32 %v341, %v343
    %v348 = vshll.u32 %v345, 16
    %v349 = vshrl.u32 %v345, 16
    %v350 = vshll.u32 %v346, 16
    %v351 = vshrl.u32 %v346, 16
    %vm352 = vc.u32 %v344, %v348
    %v353 = vsel %vm352, 1, 0
    %v354 = vadd.s32 %v344, %v348
    %v355 = vadd.s32 %v347, %v353
    %vm356 = vc.u32 %v354, %v350
    %v357 = vsel %vm356, 1, 0
    %v358 = vadd.s32 %v354, %v350
    %v359 = vadd.s32 %v355, %v357
    %v360 = vadd.s32 %v359, %v349
    %v361 = vadd.s32 %v360, %v351
    %v362 = vmul.u32 %v317, %v308
    %v363 = vadd.s32 %v339, %v358
    %vm364 = vc.u32 %v339, %v358
    %v365 = vadd.s32 %v361, 1
    %v366 = vsel %vm364, %v365, %v361
    %v367 = vadd.s32 %v362, %v366
    %v368 = vadd.s32 %v367, 536870912
    %v369 = vshrl.u32 %v368, 30
    %v370 = vshll.u32 %v369, 30
    %v371 = vsub.s32 %v367, %v370
    %vm372 = vcmp.lt.s32.totalorder %v371, 0
    %v373 = vsub.s32 0, %v371
    %v374 = vsel %vm372, %v373, %v371
    %v375 = vclz %v374
    %v376 = vsub.s32 %v375, 2
    %vm377 = vcmp.gt.s32.totalorder 0, %v376
    %v378 = vsel %vm377, 0, %v376
    %v379 = vsub.s32 32, %v378
    %v380 = vshll.u32 %v371, %v378
    %v381 = vshrl.u32 %v363, %v379
    %v382 = vor.u32 %v380, %v381
    %v383 = vsub.s32 4294967266, %v378
    %v384 = vadd.s32 %v383, 127
    %v385 = vshll.u32 %v384, 23
    %v386 = vor.u32 4788187, %v385
    %v387 = vand.u32 2147483647, %v386
    %v389 = vcvt.s32.f32 %v382
    %v390 = vmul.f32 %v389, %v387
    %v391 = vxor.u32 %v390, 2147483648
    %v392 = vsel %vm271, %v391, %v390
    %v393 = vsub.s32 4, %v369
    %v394 = vsel %vm271, %v393, %v369
    %v395 = vsel %vm270, %v113, %v392
    %v396 = vsel %vm270, 0, %v394
    %v397 = vmul.f32 %v395, %v395
    %v398 = vmul.f32 %v397, -0.001358992
    %v399 = vadd.f32 %v398, 0.041655596
    %v400 = vmul.f32 %v397, %v399
    %v401 = vadd.f32 %v400, -0.4999988
    %v402 = vmul.f32 %v397, %v401
    %v403 = vadd.f32 1.0, %v402
    %v404 = vmul.f32 %v395, %v395
    %v405 = vmul.f32 %v404, -0.00019511016
    %v406 = vadd.f32 %v405, 0.008332121
    %v407 = vmul.f32 %v404, %v406
    %v408 = vadd.f32 %v407, -0.16666654
    %v409 = vmul.f32 %v404, %v408
    %v410 = vadd.f32 %v409, 1.0
    %v411 = vmul.f32 %v410, %v395
    %vm412 = vweird.f32 %v113
    %v413 = vand.u32 %v396, 3
    %vm414 = vcmp.lt.s32.totalorder %v413, 2
    %vm415 = vcmp.eq.s32.totalorder %v413, 0
    %v416 = vxor.u32 %v411, 2147483648
    %v417 = vsel %vm415, %v403, %v416
    %vm418 = vcmp.eq.s32.totalorder %v413, 2
    %v419 = vxor.u32 %v403, 2147483648
    %v420 = vsel %vm418, %v419, %v411
    %v421 = vsel %vm414, %v417, %v420
    %v422 = vsel %vm412, nan, %v421
    %vm423 = vcmask 326656
    %424 = vst.msk [vmem:[#allocation7] sm:$0xff] %vm423, %v268
    %425 = vst.msk [vmem:[#allocation7 + $0x8] sm:$0xff] %vm423, %v422
    // Predicated region
    $region22: #{tpu_custom_call.1} parent=1 // pred_check
      _
    $region23: #{tpu_custom_call.1} parent=1 // pred_check_branch
      %427 = sbr.rel (0) target = $region25
    $region24: #{tpu_custom_call.1} parent=1 // pred_region
      %429 = vsyncadd [#allocation4], 0
      %s430 = sshll.u32 [#allocation7], 4
      %s431 = int_to_ptr.vmem [resolvable:$true] %s430
      %s432 = sshll.u32 %s3, 4
      %s433 = int_to_ptr.hbm [resolvable:$true] %s432
      %438 = dma.vmem_to_hbm [thread:$0]  %s431, 256, %s433, [#allocation4], 128, 128, 8
    $region25: #{tpu_custom_call.1} parent=1 // pred_fallthru
      _
    // Predicated region
    $region26: #{tpu_custom_call.1} parent=1 // pred_check
      _
    $region27: #{tpu_custom_call.1} parent=1 // pred_check_branch
      %440 = sbr.rel (0) target = $region29
    $region28: #{tpu_custom_call.1} parent=1 // pred_region
      %442 = dma.done [#allocation4], 256
    $region29: #{tpu_custom_call.1} parent=1 // pred_fallthru
      _
    %443 = vsyncpa [#allocation3], 1
    %444 = vsyncpa [#allocation6], 1
    %445 = vsyncpa [#allocation4], 1

</llo_original>
